<compile_context>
chip_gen: v7x
topology: tpu7x:2x2x1
jax: 0.10.0
libtpu: 0.0.40
codegen_flags: <defaults>
</compile_context>

<pallas_src>
import math

import jax
import jax.numpy as jnp
from jax.experimental import pallas as pl
from jax.experimental.pallas import tpu as pltpu

D_MODEL = 32
VOCAB_SIZE = 512
SCALE = math.sqrt(D_MODEL)          # np.sqrt(self.d_model) in the reference

# Token-tile size (rows per grid step).  Multiple of 8 (sublane).  Sized so
# the per-step working set (bf16 one-hot 2*TM*V B + i32 iota 4*TM*V B +
# table V*D*4 B + out 2*TM*D*4 B) stays in the low-MiB range even on v7x
# (64 MiB VMEM / 32 MiB default scoped limit).
TM_MAX = 512


# ---------------------------------------------------------------------------
# Kernel: one token tile per grid step; embedding table resident in VMEM.
# ---------------------------------------------------------------------------
def input_embeddings_kernel(ids_ref, table_ref, out_ref):
    # ids_ref:   (TM, 1) int32   token ids for this tile
    # table_ref: (V, D)  table dtype, resident across the grid
    # out_ref:   (TM, D) table dtype, embedding(x) * sqrt(d_model)
    tm = ids_ref.shape[0]
    v = table_ref.shape[0]

    ids = ids_ref[...]                                           # (TM, 1)
    vocab_iota = jax.lax.broadcasted_iota(jnp.int32, (tm, v), 1)
    # Exact 0/1 values, representable in bf16 -> the matmul is still an
    # exact row select up to bf16 rounding of the table entries.
    one_hot = (vocab_iota == ids).astype(jnp.bfloat16)           # (TM, V)
    table = table_ref[...].astype(jnp.bfloat16)                  # (V, D)

    # Single MXU matmul replaces the gather; f32 accumulation.
    emb = jnp.dot(one_hot, table,
                  preferred_element_type=jnp.float32)            # (TM, D)
    out_ref[...] = (emb * SCALE).astype(out_ref.dtype)


# ---------------------------------------------------------------------------
# Host-side wrapper
# ---------------------------------------------------------------------------
def input_embeddings(token_ids, embedding_table):
    """token_ids: [B, S] int, embedding_table: [V, D] -> [B, S, D]."""
    B, S = token_ids.shape
    V, D = embedding_table.shape
    n_tok = B * S

    # Token tile: multiple of 8, capped at TM_MAX.
    tm = min(TM_MAX, max(8, ((n_tok + 7) // 8) * 8))
    n_padded = pl.cdiv(n_tok, tm) * tm

    ids_flat = token_ids.reshape(n_tok).astype(jnp.int32)
    if n_padded != n_tok:
        # Pad rows select table row 0 and are sliced away afterwards.
        ids_flat = jnp.concatenate(
            [ids_flat, jnp.zeros((n_padded - n_tok,), jnp.int32)], axis=0)
    ids_col = ids_flat.reshape(n_padded, 1)

    itemsize = jnp.dtype(embedding_table.dtype).itemsize
    cost = pl.CostEstimate(
        flops=2 * n_padded * V * D,
        transcendentals=0,
        bytes_accessed=n_padded * 4 + V * D * itemsize + n_padded * D * itemsize,
    )

    out = pl.pallas_call(
        input_embeddings_kernel,
        out_shape=jax.ShapeDtypeStruct((n_padded, D), embedding_table.dtype),
        grid_spec=pltpu.PrefetchScalarGridSpec(
            num_scalar_prefetch=0,
            grid=(n_padded // tm,),
            in_specs=[
                pl.BlockSpec((tm, 1), lambda i: (i, 0)),   # token ids
                pl.BlockSpec((V, D), lambda i: (0, 0)),    # table, resident
            ],
            out_specs=pl.BlockSpec((tm, D), lambda i: (i, 0)),
        ),
        compiler_params=pltpu.CompilerParams(
            dimension_semantics=("parallel",),             # shard tokens on v7x
            vmem_limit_bytes=32 * 1024 * 1024,
        ),
        cost_estimate=cost,
    )(ids_col, embedding_table)

    return out[:n_tok].reshape(B, S, D)


if __name__ == "__main__":
    B, S = 2, 8
    key = jax.random.PRNGKey(0)
    k_ids, k_emb = jax.random.split(key)

    token_ids = jax.random.randint(k_ids, (B, S), 0, VOCAB_SIZE, jnp.int32)
    # nn.Embedding default init: N(0, 1)
    embedding_table = jax.random.normal(
        k_emb, (VOCAB_SIZE, D_MODEL), jnp.float32)

    out = input_embeddings(token_ids, embedding_table)
    out = jax.block_until_ready(out)

    # Pure-JAX reference mirroring the PyTorch forward exactly.
    ref = embedding_table[token_ids] * SCALE

    assert out.shape == (B, S, D_MODEL)
    assert out.dtype == embedding_table.dtype
    max_err = float(jnp.max(jnp.abs(out - ref)))
    assert jnp.allclose(out, ref, rtol=1e-2, atol=1e-2), f"max_err={max_err}"
    print("KERNEL_OK")
</pallas_src>

<mosaic_0001>
module attributes {stable_mosaic.version = 11 : i64} {
  func.func @input_embeddings_kernel(%arg0: i32, %arg1: memref<16x1xi32, #tpu.memory_space<vmem>>, %arg2: memref<512x32xf32, #tpu.memory_space<vmem>>, %arg3: memref<16x32xf32, #tpu.memory_space<vmem>>) attributes {dimension_semantics = [#tpu.dimension_semantics<parallel>], iteration_bounds = array<i64: 1>, scalar_prefetch = 0 : i64, scratch_operands = 0 : i64, tpu.core_type = #tpu.core_type<tc>, window_params = [{transform_indices = @transform_0, window_bounds = array<i64: 16, 1>}, {pipeline_mode = #tpu.pipeline_mode<synchronous>, transform_indices = @transform_1, window_bounds = array<i64: 512, 32>}, {transform_indices = @transform_2, window_bounds = array<i64: 16, 32>}]} {
    %c0 = arith.constant 0 : index
    %c0_0 = arith.constant 0 : index
    %0 = vector.load %arg1[%c0, %c0_0] : memref<16x1xi32, #tpu.memory_space<vmem>>, vector<16x1xi32>
    %1 = tpu.iota {dimensions = array<i32: 1>} : vector<16x512xi32>
    %2 = vector.broadcast %0 : vector<16x1xi32> to vector<16x512xi32>
    %3 = arith.cmpi eq, %1, %2 : vector<16x512xi32>
    %4 = arith.extui %3 : vector<16x512xi1> to vector<16x512xi32>
    %5 = arith.sitofp %4 : vector<16x512xi32> to vector<16x512xf32>
    %6 = arith.truncf %5 : vector<16x512xf32> to vector<16x512xbf16>
    %c0_1 = arith.constant 0 : index
    %c0_2 = arith.constant 0 : index
    %7 = vector.load %arg2[%c0_1, %c0_2] : memref<512x32xf32, #tpu.memory_space<vmem>>, vector<512x32xf32>
    %8 = arith.truncf %7 : vector<512x32xf32> to vector<512x32xbf16>
    %cst = arith.constant dense<0.000000e+00> : vector<16x32xf32>
    %9 = tpu.matmul %6, %8, %cst {dimension_numbers = #tpu.dot_dimension_numbers<[1], [0], [0], [1], [0, 0, 1, 1], [], []>} : vector<16x512xbf16>, vector<512x32xbf16>, vector<16x32xf32> -> vector<16x32xf32>
    %cst_3 = arith.constant 5.65685415 : f32
    %10 = vector.broadcast %cst_3 : f32 to vector<16x32xf32>
    %11 = arith.mulf %9, %10 : vector<16x32xf32>
    %c0_4 = arith.constant 0 : index
    %c0_5 = arith.constant 0 : index
    %12 = vector.load %arg3[%c0_4, %c0_5] : memref<16x32xf32, #tpu.memory_space<vmem>>, vector<16x32xf32>
    tpu.vector_store %arg3[%c0_4, %c0_5], %11 {strides = array<i32>} : memref<16x32xf32, #tpu.memory_space<vmem>>, vector<16x32xf32>,
    return
  }
  func.func @transform_0(%arg0: i32) -> (i32, i32) {
    %c0_i32 = arith.constant 0 : i32
    %c0_i32_0 = arith.constant 0 : i32
    return %arg0, %c0_i32 : i32, i32
  }
  func.func @transform_1(%arg0: i32) -> (i32, i32) {
    %c0_i32 = arith.constant 0 : i32
    %c0_i32_0 = arith.constant 0 : i32
    %c0_i32_1 = arith.constant 0 : i32
    return %c0_i32, %c0_i32_0 : i32, i32
  }
  func.func @transform_2(%arg0: i32) -> (i32, i32) {
    %c0_i32 = arith.constant 0 : i32
    %c0_i32_0 = arith.constant 0 : i32
    return %arg0, %c0_i32 : i32, i32
  }
}

</mosaic_0001>

<llo_original>
// kernel: tpu_custom_call.1
$region0: #{tpu_custom_call.1}
  #allocation0 [shape = 'u32[]', space=smem, size = 0x4, offset = 0x4, fixed_abs, tag = 'smem constant byte address 0x4 - core index']
  #allocation1 [shape = 'u32[144,128]{1,0:T(1,128)}', space=vmem, size = 0x12000, scoped, tag = 'internal scratch']
  %s0 = inlined_call_operand.vmem [shape: s32[16,1], index: 0, kind: input, shape index: {}]
  %s1 = inlined_call_operand.vmem [shape: f32[512,32], index: 1, kind: input, shape index: {}]
  %s2 = inlined_call_operand.hbm [shape: f32[16,32], index: 2, kind: output, shape index: {}]
  %s3 = sld [smem:[#allocation0]]
  $region18: #{tpu_custom_call.1} parent=0
    _
  %s5 = ssub.s32 1, %s3
  %s6 = scalar_select 0, %s5, %s3
  $region1: #{tpu_custom_call.1} parent=0
    #allocation2 [shape = 'u8[8192]{0}', space=vmem, size = 0x2000, scoped, tag = 'output window, operand 0, single buffered']
    #allocation3 [shape = 's32[1]{0}', space=sflag, size = 0x4, scoped, tag = 'scoped memory for tpu_custom_call.1']
    %7 = vsyncpa [#allocation3], 0
    // Predicated region
    $region2: #{tpu_custom_call.1} parent=1 // pred_check
      _
    $region3: #{tpu_custom_call.1} parent=1 // pred_check_branch
      %9 = sbr.rel (0) target = $region5
    $region4: #{tpu_custom_call.1} parent=1 // pred_region
      _
    $region5: #{tpu_custom_call.1} parent=1 // pred_fallthru
      _
    // Predicated region
    $region6: #{tpu_custom_call.1} parent=1 // pred_check
      _
    $region7: #{tpu_custom_call.1} parent=1 // pred_check_branch
      %11 = sbr.rel (0) target = $region9
    $region8: #{tpu_custom_call.1} parent=1 // pred_region
      _
    $region9: #{tpu_custom_call.1} parent=1 // pred_fallthru
      _
    %v13 = vld [vmem:[%s0] sm:$0xff]
    %v14 = vld [vmem:[%s0 + $0x8] sm:$0xff]
    %v15 = vlaneseq
    %v16 = vand.u32 %v15, 127
    %v17 = vadd.s32 %v16, 128
    %v18 = vadd.s32 %v16, 256
    %v19 = vadd.s32 %v16, 384
    %20 = vset.pattern.permute.xlu0 0
    %21 = vperm.xlu0 %20, %v13
    %v22 = vpop.permute.xlu0 %21
    %23 = vset.pattern.permute.xlu0 0
    %24 = vperm.xlu0 %23, %v14
    %v25 = vpop.permute.xlu0 %24
    %vm26 = vcmp.eq.s32.totalorder %v16, %v22
    %vm27 = vcmp.eq.s32.totalorder %v17, %v22
    %vm28 = vcmp.eq.s32.totalorder %v18, %v22
    %vm29 = vcmp.eq.s32.totalorder %v19, %v22
    %vm30 = vcmp.eq.s32.totalorder %v16, %v25
    %vm31 = vcmp.eq.s32.totalorder %v17, %v25
    %vm32 = vcmp.eq.s32.totalorder %v18, %v25
    %vm33 = vcmp.eq.s32.totalorder %v19, %v25
    %v34 = vsel %vm26, 1, 0
    %v35 = vsel %vm27, 1, 0
    %v36 = vsel %vm28, 1, 0
    %v37 = vsel %vm29, 1, 0
    %v38 = vsel %vm30, 1, 0
    %v39 = vsel %vm31, 1, 0
    %v40 = vsel %vm32, 1, 0
    %v41 = vsel %vm33, 1, 0
    %v42 = vcvt.s32.f32 %v34
    %v43 = vcvt.s32.f32 %v35
    %v44 = vcvt.s32.f32 %v36
    %v45 = vcvt.s32.f32 %v37
    %v46 = vcvt.s32.f32 %v38
    %v47 = vcvt.s32.f32 %v39
    %v48 = vcvt.s32.f32 %v40
    %v49 = vcvt.s32.f32 %v41
    %v50 = vpack.c.bf16 %v46, %v42
    %v51 = vpack.c.bf16 %v47, %v43
    %v52 = vpack.c.bf16 %v48, %v44
    %v53 = vpack.c.bf16 %v49, %v45
    %v54 = vld [vmem:[%s1] sm:$0xff]
    %v55 = vld [vmem:[%s1 + $0x8] sm:$0xff]
    %v56 = vld [vmem:[%s1 + $0x10] sm:$0xff]
    %v57 = vld [vmem:[%s1 + $0x18] sm:$0xff]
    %v58 = vld [vmem:[%s1 + $0x20] sm:$0xff]
    %v59 = vld [vmem:[%s1 + $0x28] sm:$0xff]
    %v60 = vld [vmem:[%s1 + $0x30] sm:$0xff]
    %v61 = vld [vmem:[%s1 + $0x38] sm:$0xff]
    %v62 = vld [vmem:[%s1 + $0x40] sm:$0xff]
    %v63 = vld [vmem:[%s1 + $0x48] sm:$0xff]
    %v64 = vld [vmem:[%s1 + $0x50] sm:$0xff]
    %v65 = vld [vmem:[%s1 + $0x58] sm:$0xff]
    %v66 = vld [vmem:[%s1 + $0x60] sm:$0xff]
    %v67 = vld [vmem:[%s1 + $0x68] sm:$0xff]
    %v68 = vld [vmem:[%s1 + $0x70] sm:$0xff]
    %v69 = vld [vmem:[%s1 + $0x78] sm:$0xff]
    %v70 = vld [vmem:[%s1 + $0x80] sm:$0xff]
    %v71 = vld [vmem:[%s1 + $0x88] sm:$0xff]
    %v72 = vld [vmem:[%s1 + $0x90] sm:$0xff]
    %v73 = vld [vmem:[%s1 + $0x98] sm:$0xff]
    %v74 = vld [vmem:[%s1 + $0xa0] sm:$0xff]
    %v75 = vld [vmem:[%s1 + $0xa8] sm:$0xff]
    %v76 = vld [vmem:[%s1 + $0xb0] sm:$0xff]
    %v77 = vld [vmem:[%s1 + $0xb8] sm:$0xff]
    %v78 = vld [vmem:[%s1 + $0xc0] sm:$0xff]
    %v79 = vld [vmem:[%s1 + $0xc8] sm:$0xff]
    %v80 = vld [vmem:[%s1 + $0xd0] sm:$0xff]
    %v81 = vld [vmem:[%s1 + $0xd8] sm:$0xff]
    %v82 = vld [vmem:[%s1 + $0xe0] sm:$0xff]
    %v83 = vld [vmem:[%s1 + $0xe8] sm:$0xff]
    %v84 = vld [vmem:[%s1 + $0xf0] sm:$0xff]
    %v85 = vld [vmem:[%s1 + $0xf8] sm:$0xff]
    %v86 = vld [vmem:[%s1 + $0x100] sm:$0xff]
    %v87 = vld [vmem:[%s1 + $0x108] sm:$0xff]
    %v88 = vld [vmem:[%s1 + $0x110] sm:$0xff]
    %v89 = vld [vmem:[%s1 + $0x118] sm:$0xff]
    %v90 = vld [vmem:[%s1 + $0x120] sm:$0xff]
    %v91 = vld [vmem:[%s1 + $0x128] sm:$0xff]
    %v92 = vld [vmem:[%s1 + $0x130] sm:$0xff]
    %v93 = vld [vmem:[%s1 + $0x138] sm:$0xff]
    %v94 = vld [vmem:[%s1 + $0x140] sm:$0xff]
    %v95 = vld [vmem:[%s1 + $0x148] sm:$0xff]
    %v96 = vld [vmem:[%s1 + $0x150] sm:$0xff]
    %v97 = vld [vmem:[%s1 + $0x158] sm:$0xff]
    %v98 = vld [vmem:[%s1 + $0x160] sm:$0xff]
    %v99 = vld [vmem:[%s1 + $0x168] sm:$0xff]
    %v100 = vld [vmem:[%s1 + $0x170] sm:$0xff]
    %v101 = vld [vmem:[%s1 + $0x178] sm:$0xff]
    %v102 = vld [vmem:[%s1 + $0x180] sm:$0xff]
    %v103 = vld [vmem:[%s1 + $0x188] sm:$0xff]
    %v104 = vld [vmem:[%s1 + $0x190] sm:$0xff]
    %v105 = vld [vmem:[%s1 + $0x198] sm:$0xff]
    %v106 = vld [vmem:[%s1 + $0x1a0] sm:$0xff]
    %v107 = vld [vmem:[%s1 + $0x1a8] sm:$0xff]
    %v108 = vld [vmem:[%s1 + $0x1b0] sm:$0xff]
    %v109 = vld [vmem:[%s1 + $0x1b8] sm:$0xff]
    %v110 = vld [vmem:[%s1 + $0x1c0] sm:$0xff]
    %v111 = vld [vmem:[%s1 + $0x1c8] sm:$0xff]
    %v112 = vld [vmem:[%s1 + $0x1d0] sm:$0xff]
    %v113 = vld [vmem:[%s1 + $0x1d8] sm:$0xff]
    %v114 = vld [vmem:[%s1 + $0x1e0] sm:$0xff]
    %v115 = vld [vmem:[%s1 + $0x1e8] sm:$0xff]
    %v116 = vld [vmem:[%s1 + $0x1f0] sm:$0xff]
    %v117 = vld [vmem:[%s1 + $0x1f8] sm:$0xff]
    %v118 = vpack.c.bf16 %v55, %v54
    %v119 = vpack.c.bf16 %v57, %v56
    %v120 = vpack.c.bf16 %v59, %v58
    %v121 = vpack.c.bf16 %v61, %v60
    %v122 = vpack.c.bf16 %v63, %v62
    %v123 = vpack.c.bf16 %v65, %v64
    %v124 = vpack.c.bf16 %v67, %v66
    %v125 = vpack.c.bf16 %v69, %v68
    %v126 = vpack.c.bf16 %v71, %v70
    %v127 = vpack.c.bf16 %v73, %v72
    %v128 = vpack.c.bf16 %v75, %v74
    %v129 = vpack.c.bf16 %v77, %v76
    %v130 = vpack.c.bf16 %v79, %v78
    %v131 = vpack.c.bf16 %v81, %v80
    %v132 = vpack.c.bf16 %v83, %v82
    %v133 = vpack.c.bf16 %v85, %v84
    %v134 = vpack.c.bf16 %v87, %v86
    %v135 = vpack.c.bf16 %v89, %v88
    %v136 = vpack.c.bf16 %v91, %v90
    %v137 = vpack.c.bf16 %v93, %v92
    %v138 = vpack.c.bf16 %v95, %v94
    %v139 = vpack.c.bf16 %v97, %v96
    %v140 = vpack.c.bf16 %v99, %v98
    %v141 = vpack.c.bf16 %v101, %v100
    %v142 = vpack.c.bf16 %v103, %v102
    %v143 = vpack.c.bf16 %v105, %v104
    %v144 = vpack.c.bf16 %v107, %v106
    %v145 = vpack.c.bf16 %v109, %v108
    %v146 = vpack.c.bf16 %v111, %v110
    %v147 = vpack.c.bf16 %v113, %v112
    %v148 = vpack.c.bf16 %v115, %v114
    %v149 = vpack.c.bf16 %v117, %v116
    %150 = vmatprep.subr.bf16.mxu0 0
    %151 = vmatpush1.bf16.msra.mxu0 %v118
    %152 = vmatprep.subr.bf16.mxu0 0
    %153 = vmatpush1.bf16.msra.mxu0 %v119
    %154 = vmatprep.subr.bf16.mxu0 0
    %155 = vmatpush1.bf16.msra.mxu0 %v120
    %156 = vmatprep.subr.bf16.mxu0 0
    %157 = vmatpush1.bf16.msra.mxu0 %v121
    %158 = vmatprep.subr.bf16.mxu0 0
    %159 = vmatpush1.bf16.msra.mxu0 %v122
    %160 = vmatprep.subr.bf16.mxu0 0
    %161 = vmatpush1.bf16.msra.mxu0 %v123
    %162 = vmatprep.subr.bf16.mxu0 0
    %163 = vmatpush1.bf16.msra.mxu0 %v124
    %164 = vmatprep.subr.bf16.mxu0 0
    %165 = vmatpush1.bf16.msra.mxu0 %v125
    %166 = vmatprep.subr.bf16.mxu0 0
    %167 = vmatpush1.bf16.msra.mxu0 %v126
    %168 = vmatprep.subr.bf16.mxu0 0
    %169 = vmatpush1.bf16.msra.mxu0 %v127
    %170 = vmatprep.subr.bf16.mxu0 0
    %171 = vmatpush1.bf16.msra.mxu0 %v128
    %172 = vmatprep.subr.bf16.mxu0 0
    %173 = vmatpush1.bf16.msra.mxu0 %v129
    %174 = vmatprep.subr.bf16.mxu0 0
    %175 = vmatpush1.bf16.msra.mxu0 %v130
    %176 = vmatprep.subr.bf16.mxu0 0
    %177 = vmatpush1.bf16.msra.mxu0 %v131
    %178 = vmatprep.subr.bf16.mxu0 0
    %179 = vmatpush1.bf16.msra.mxu0 %v132
    %180 = vmatprep.subr.bf16.mxu0 0
    %181 = vmatpush1.bf16.msra.mxu0 %v133
    %182 = vmatprep.mubr.bf16.mxu0 %v51
    %183 = vmatmul.mubr.bf16.gmra.mrb[0].mxu0 %v50
    %v184 = vpop.f32.mrb[0].mxu0
    %v185 = vadd.f32 0.0, %v184
    %v186 = vpop.f32.mrb[0].mxu0
    %v187 = vpop.f32.mrb[0].mxu0
    %v188 = vadd.f32 0.0, %v187
    %v189 = vpop.f32.mrb[0].mxu0
    %190 = vdwg.mxu0
    %191 = vmatprep.subr.bf16.mxu0 0
    %192 = vmatpush1.bf16.msra.mxu0 %v134
    %193 = vmatprep.subr.bf16.mxu0 0
    %194 = vmatpush1.bf16.msra.mxu0 %v135
    %195 = vmatprep.subr.bf16.mxu0 0
    %196 = vmatpush1.bf16.msra.mxu0 %v136
    %197 = vmatprep.subr.bf16.mxu0 0
    %198 = vmatpush1.bf16.msra.mxu0 %v137
    %199 = vmatprep.subr.bf16.mxu0 0
    %200 = vmatpush1.bf16.msra.mxu0 %v138
    %201 = vmatprep.subr.bf16.mxu0 0
    %202 = vmatpush1.bf16.msra.mxu0 %v139
    %203 = vmatprep.subr.bf16.mxu0 0
    %204 = vmatpush1.bf16.msra.mxu0 %v140
    %205 = vmatprep.subr.bf16.mxu0 0
    %206 = vmatpush1.bf16.msra.mxu0 %v141
    %207 = vmatprep.subr.bf16.mxu0 0
    %208 = vmatpush1.bf16.msra.mxu0 %v142
    %209 = vmatprep.subr.bf16.mxu0 0
    %210 = vmatpush1.bf16.msra.mxu0 %v143
    %211 = vmatprep.subr.bf16.mxu0 0
    %212 = vmatpush1.bf16.msra.mxu0 %v144
    %213 = vmatprep.subr.bf16.mxu0 0
    %214 = vmatpush1.bf16.msra.mxu0 %v145
    %215 = vmatprep.subr.bf16.mxu0 0
    %216 = vmatpush1.bf16.msra.mxu0 %v146
    %217 = vmatprep.subr.bf16.mxu0 0
    %218 = vmatpush1.bf16.msra.mxu0 %v147
    %219 = vmatprep.subr.bf16.mxu0 0
    %220 = vmatpush1.bf16.msra.mxu0 %v148
    %221 = vmatprep.subr.bf16.mxu0 0
    %222 = vmatpush1.bf16.msra.mxu0 %v149
    %223 = vmatprep.mubr.bf16.mxu0 %v53
    %224 = vmatmul.mubr.bf16.gmra.mrb[0].mxu0 %v52
    %v225 = vpop.f32.mrb[0].mxu0
    %v226 = vadd.f32 %v185, %v225
    %v227 = vpop.f32.mrb[0].mxu0
    %v228 = vpop.f32.mrb[0].mxu0
    %v229 = vadd.f32 %v188, %v228
    %v230 = vpop.f32.mrb[0].mxu0
    %231 = vdwg.mxu0
    %v232 = vmul.f32 %v226, 5.656854
    %v233 = vmul.f32 %v229, 5.656854
    %vm234 = vcmask 261120
    %235 = vst.msk [vmem:[#allocation2] sm:$0xff] %vm234, %v232
    %236 = vst.msk [vmem:[#allocation2 + $0x8] sm:$0xff] %vm234, %v233
    // Predicated region
    $region10: #{tpu_custom_call.1} parent=1 // pred_check
      _
    $region11: #{tpu_custom_call.1} parent=1 // pred_check_branch
      %238 = sbr.rel (0) target = $region13
    $region12: #{tpu_custom_call.1} parent=1 // pred_region
      %s240 = ssub.s32 256, 256
      %241 = vsyncadd [#allocation3], %s240
      %s242 = sshll.u32 [#allocation2], 4
      %s243 = int_to_ptr.vmem [resolvable:$true] %s242
      %248 = dma.vmem_to_hbm [thread:$0]  %s243, 256, %s2, [#allocation3], 128, 128, 8
    $region13: #{tpu_custom_call.1} parent=1 // pred_fallthru
      _
    // Predicated region
    $region14: #{tpu_custom_call.1} parent=1 // pred_check
      _
    $region15: #{tpu_custom_call.1} parent=1 // pred_check_branch
      %250 = sbr.rel (0) target = $region17
    $region16: #{tpu_custom_call.1} parent=1 // pred_region
      %251 = dma.done [#allocation3], 256
    $region17: #{tpu_custom_call.1} parent=1 // pred_fallthru
      _
    %252 = vsyncpa [#allocation3], 1

</llo_original>
